<compile_context>
chip_gen: v6e
topology: v6e:2x2x1
jax: 0.10.0
libtpu: 0.0.40
codegen_flags: <defaults>
</compile_context>

<pallas_src>
import math
from functools import partial

import numpy as np
import jax
import jax.numpy as jnp
from jax import lax
from jax.experimental import pallas as pl
from jax.experimental.pallas import tpu as pltpu


# ------------------------------ configuration ------------------------------
IMG_SIZE = 16
PATCH = 4
IN_CHANS = 3
EMBED_DIM = 32
DEPTH = 2
NUM_HEADS = 4
DEC_EMBED_DIM = 32
DEC_DEPTH = 1
DEC_NUM_HEADS = 4
MLP_RATIO = 4.0
GRID_SZ = IMG_SIZE // PATCH
NUM_PATCHES = GRID_SZ * GRID_SZ
LN_EPS = 1e-5


# --------------------------- in-kernel math helpers -------------------------
def _ln_val(x, w, b, eps):
    mean = jnp.mean(x, axis=-1, keepdims=True)
    c = x - mean
    var = jnp.mean(c * c, axis=-1, keepdims=True)
    return c * lax.rsqrt(var + eps) * w + b


_ERF_P = 0.3275911
_ERF_A1 = 0.254829592
_ERF_A2 = -0.284496736
_ERF_A3 = 1.421413741
_ERF_A4 = -1.453152027
_ERF_A5 = 1.061405429


def _erf_approx(x):
    # Abramowitz & Stegun 7.1.26 rational approximation of erf, |error| <= 1.5e-7,
    # i.e. float32-level agreement with the exact erf used by torch.nn.GELU().
    # TODO(synk): switch to lax.erf once an erf lowering is guaranteed in Mosaic.
    sign = jnp.where(x >= 0.0, 1.0, -1.0)
    ax = jnp.abs(x)
    t = 1.0 / (1.0 + _ERF_P * ax)
    poly = ((((_ERF_A5 * t + _ERF_A4) * t + _ERF_A3) * t + _ERF_A2) * t + _ERF_A1) * t
    return sign * (1.0 - poly * jnp.exp(-ax * ax))


def _gelu_exact(x):
    return 0.5 * x * (1.0 + _erf_approx(x * 0.7071067811865476))


def _softmax_last(s):
    m = jnp.max(s, axis=-1, keepdims=True)
    e = jnp.exp(s - m)
    return e / jnp.sum(e, axis=-1, keepdims=True)


# ------------------------------ small fused kernels --------------------------
def _linear_kernel(x_ref, w_ref, b_ref, o_ref):
    o_ref[...] = (jnp.dot(x_ref[...], w_ref[...], preferred_element_type=jnp.float32)
                  + b_ref[...]).astype(o_ref.dtype)


def pallas_linear(x2d, w, b):
    M, _ = x2d.shape
    N = w.shape[1]
    return pl.pallas_call(
        _linear_kernel,
        out_shape=jax.ShapeDtypeStruct((M, N), jnp.float32),
    )(x2d.astype(jnp.float32), w.astype(jnp.float32),
      b.reshape(1, N).astype(jnp.float32))


def _layernorm_kernel(x_ref, w_ref, b_ref, o_ref, *, eps):
    o_ref[...] = _ln_val(x_ref[...], w_ref[...], b_ref[...], eps).astype(o_ref.dtype)


def pallas_layernorm(x2d, w, b, eps=LN_EPS):
    M, D = x2d.shape
    return pl.pallas_call(
        partial(_layernorm_kernel, eps=eps),
        out_shape=jax.ShapeDtypeStruct((M, D), jnp.float32),
    )(x2d.astype(jnp.float32), w.reshape(1, D).astype(jnp.float32),
      b.reshape(1, D).astype(jnp.float32))


def _ln_linear_kernel(x_ref, nw_ref, nb_ref, w_ref, b_ref, o_ref, *, eps):
    h = _ln_val(x_ref[...], nw_ref[...], nb_ref[...], eps)
    o_ref[...] = (jnp.dot(h, w_ref[...], preferred_element_type=jnp.float32)
                  + b_ref[...]).astype(o_ref.dtype)


def pallas_ln_linear(x2d, nw, nb, w, b, eps=LN_EPS):
    # decoder_norm + decoder_pred fused into one call
    M, D = x2d.shape
    N = w.shape[1]
    return pl.pallas_call(
        partial(_ln_linear_kernel, eps=eps),
        out_shape=jax.ShapeDtypeStruct((M, N), jnp.float32),
    )(x2d.astype(jnp.float32), nw.reshape(1, D).astype(jnp.float32),
      nb.reshape(1, D).astype(jnp.float32), w.astype(jnp.float32),
      b.reshape(1, N).astype(jnp.float32))


# ------------------------- fused transformer block ---------------------------
def _block_kernel(x_ref, n1w, n1b, wq, wk, wv, bq, bk, bv, pwh, pb,
                  n2w, n2b, f1w, f1b, f2w, f2b, o_ref, *attn_out,
                  num_heads, scale, eps, emit_attn):
    x = x_ref[0]                                 # (N, D)
    h = _ln_val(x, n1w[...], n1b[...], eps)      # LN1

    proj_acc = None
    attn_acc = None
    for hh in range(num_heads):                  # static, unrolled head loop
        qh = jnp.dot(h, wq[hh], preferred_element_type=jnp.float32) + bq[hh]
        kh = jnp.dot(h, wk[hh], preferred_element_type=jnp.float32) + bk[hh]
        vh = jnp.dot(h, wv[hh], preferred_element_type=jnp.float32) + bv[hh]
        s = lax.dot_general(qh, kh, (((1,), (1,)), ((), ())),
                            preferred_element_type=jnp.float32) * scale
        p = _softmax_last(s)                     # (N, N) attention probs
        if emit_attn:
            attn_acc = p if attn_acc is None else attn_acc + p
        oh = jnp.dot(p, vh, preferred_element_type=jnp.float32)        # (N, hd)
        c = jnp.dot(oh, pwh[hh], preferred_element_type=jnp.float32)   # (N, D)
        proj_acc = c if proj_acc is None else proj_acc + c

    x = x + proj_acc + pb[...]                   # attn projection + residual
    h2 = _ln_val(x, n2w[...], n2b[...], eps)     # LN2
    hid = jnp.dot(h2, f1w[...], preferred_element_type=jnp.float32) + f1b[...]
    hid = _gelu_exact(hid)                       # GELU fused in-kernel
    mlp = jnp.dot(hid, f2w[...], preferred_element_type=jnp.float32) + f2b[...]
    o_ref[0] = x + mlp
    if emit_attn:
        attn_out[0][0] = attn_acc                # head-summed softmax attention


_BLOCK_WEIGHT_KEYS = ("n1w", "n1b", "wq", "wk", "wv", "bq", "bk", "bv",
                      "pwh", "pb", "n2w", "n2b", "f1w", "f1b", "f2w", "f2b")


def _zero_map(nd):
    return lambda b: (0,) * nd


def fused_block(x, p, emit_attn=False):
    B, N, D = x.shape
    H = p["num_heads"]
    hd = D // H
    weights = [p[k] for k in _BLOCK_WEIGHT_KEYS]
    in_specs = [pl.BlockSpec((1, N, D), lambda b: (b, 0, 0))]
    in_specs += [pl.BlockSpec(w.shape, _zero_map(w.ndim)) for w in weights]
    if emit_attn:
        out_shape = (jax.ShapeDtypeStruct((B, N, D), jnp.float32),
                     jax.ShapeDtypeStruct((B, N, N), jnp.float32))
        out_specs = (pl.BlockSpec((1, N, D), lambda b: (b, 0, 0)),
                     pl.BlockSpec((1, N, N), lambda b: (b, 0, 0)))
    else:
        out_shape = jax.ShapeDtypeStruct((B, N, D), jnp.float32)
        out_specs = pl.BlockSpec((1, N, D), lambda b: (b, 0, 0))
    out = pl.pallas_call(
        partial(_block_kernel, num_heads=H, scale=hd ** (-0.5), eps=LN_EPS,
                emit_attn=emit_attn),
        out_shape=out_shape,
        grid=(B,),
        in_specs=in_specs,
        out_specs=out_specs,
        compiler_params=pltpu.CompilerParams(dimension_semantics=("parallel",)),
    )(x.astype(jnp.float32), *weights)
    if emit_attn:
        return out[0], out[1]
    return out, None


# ------------------------------ fused EM kernel ------------------------------
def _em_kernel(x_ref, xt_ref, mu0_ref, mu_ref, z_ref, *, stage_num, kappa):
    x = x_ref[0]       # (C, M)
    xt = xt_ref[0]     # (M, C)
    mu = mu0_ref[0]    # (C, K)
    for _ in range(stage_num):                   # static, unrolled EM loop
        z = _softmax_last(kappa * jnp.dot(xt, mu, preferred_element_type=jnp.float32))
        z = z / (1e-6 + jnp.sum(z, axis=0, keepdims=True))
        mu = jnp.dot(x, z, preferred_element_type=jnp.float32)
        mu = mu / (1e-6 + jnp.sqrt(jnp.sum(mu * mu, axis=0, keepdims=True)))
    z = _softmax_last(kappa * jnp.dot(xt, mu, preferred_element_type=jnp.float32))
    z = z / (1e-6 + jnp.sum(z, axis=0, keepdims=True))
    mu_ref[0] = mu
    z_ref[0] = z


def EM_jax(x, key, stage_num=10, k=3):
    # x: (B, C, M)
    kappa = 40.0
    B, C, M = x.shape
    mu0 = jax.random.normal(key, (1, C, k), jnp.float32) * math.sqrt(2.0 / k)
    mu0 = mu0 / (1e-6 + jnp.linalg.norm(mu0, axis=1, keepdims=True))
    xt = jnp.transpose(x, (0, 2, 1))
    mu, z = pl.pallas_call(
        partial(_em_kernel, stage_num=stage_num, kappa=kappa),
        out_shape=(jax.ShapeDtypeStruct((B, C, k), jnp.float32),
                   jax.ShapeDtypeStruct((B, M, k), jnp.float32)),
        grid=(B,),
        in_specs=[pl.BlockSpec((1, C, M), lambda b: (b, 0, 0)),
                  pl.BlockSpec((1, M, C), lambda b: (b, 0, 0)),
                  pl.BlockSpec((1, C, k), lambda b: (0, 0, 0))],
        out_specs=(pl.BlockSpec((1, C, k), lambda b: (b, 0, 0)),
                   pl.BlockSpec((1, M, k), lambda b: (b, 0, 0))),
        compiler_params=pltpu.CompilerParams(dimension_semantics=("parallel",)),
    )(x.astype(jnp.float32), xt.astype(jnp.float32), mu0.astype(jnp.float32))
    return jnp.transpose(mu, (0, 2, 1)), z


# ------------------------------- loss kernel ---------------------------------
def _masked_mse_kernel(pred_ref, tgt_ref, mask_ref, loss_ref):
    d = pred_ref[...].astype(jnp.float32) - tgt_ref[...].astype(jnp.float32)
    per_tok = jnp.mean(d * d, axis=-1)           # (B, L)
    m = mask_ref[...].astype(jnp.float32)        # (B, L)
    num = jnp.sum(jnp.sum(per_tok * m, axis=1, keepdims=True), axis=0, keepdims=True)
    den = jnp.sum(jnp.sum(m, axis=1, keepdims=True), axis=0, keepdims=True)
    loss_ref[...] = num / den


def pallas_masked_mse(pred, target, mask):
    loss = pl.pallas_call(
        _masked_mse_kernel,
        out_shape=jax.ShapeDtypeStruct((1, 1), jnp.float32),
    )(pred.astype(jnp.float32), target.astype(jnp.float32), mask.astype(jnp.float32))
    return loss[0, 0]


# ---------------------- sin-cos positional embeddings ------------------------
def _get_1d_sincos(embed_dim, pos):
    omega = np.arange(embed_dim // 2, dtype=np.float32)
    omega /= embed_dim / 2.0
    omega = 1.0 / 10000 ** omega
    pos = pos.reshape(-1)
    out = np.einsum("m,d->md", pos, omega)
    return np.concatenate([np.sin(out), np.cos(out)], axis=1)


def get_2d_sincos_pos_embed(embed_dim, grid_size, cls_token=False):
    grid_h = np.arange(grid_size, dtype=np.float32)
    grid_w = np.arange(grid_size, dtype=np.float32)
    grid = np.meshgrid(grid_w, grid_h)
    grid = np.stack(grid, axis=0).reshape([2, 1, grid_size, grid_size])
    emb_h = _get_1d_sincos(embed_dim // 2, grid[0])
    emb_w = _get_1d_sincos(embed_dim // 2, grid[1])
    pos = np.concatenate([emb_h, emb_w], axis=1)
    if cls_token:
        pos = np.concatenate([np.zeros([1, embed_dim], dtype=np.float32), pos], axis=0)
    return pos.astype(np.float32)


# ------------------------------ parameter init -------------------------------
def _xavier_uniform(key, fan_in, fan_out, shape):
    a = math.sqrt(6.0 / (fan_in + fan_out))
    return jax.random.uniform(key, shape, jnp.float32, -a, a)


def init_block(key, dim, num_heads, mlp_ratio):
    ks = jax.random.split(key, 4)
    hidden = int(dim * mlp_ratio)
    hd = dim // num_heads
    qkv_w = _xavier_uniform(ks[0], dim, dim * 3, (dim, dim * 3))
    qkv_b = jnp.zeros((dim * 3,), jnp.float32)
    proj_w = _xavier_uniform(ks[1], dim, dim, (dim, dim))
    # head-split weight layouts (leading head axis -> safe static-index loads in-kernel)
    w3 = qkv_w.reshape(dim, 3, num_heads, hd)
    b3 = qkv_b.reshape(3, num_heads, 1, hd)
    return dict(
        n1w=jnp.ones((1, dim), jnp.float32), n1b=jnp.zeros((1, dim), jnp.float32),
        wq=jnp.transpose(w3[:, 0], (1, 0, 2)),          # (H, D, hd)
        wk=jnp.transpose(w3[:, 1], (1, 0, 2)),
        wv=jnp.transpose(w3[:, 2], (1, 0, 2)),
        bq=b3[0], bk=b3[1], bv=b3[2],                   # (H, 1, hd)
        pwh=proj_w.reshape(num_heads, hd, dim),         # (H, hd, D)
        pb=jnp.zeros((1, dim), jnp.float32),
        n2w=jnp.ones((1, dim), jnp.float32), n2b=jnp.zeros((1, dim), jnp.float32),
        f1w=_xavier_uniform(ks[2], dim, hidden, (dim, hidden)),
        f1b=jnp.zeros((1, hidden), jnp.float32),
        f2w=_xavier_uniform(ks[3], hidden, dim, (hidden, dim)),
        f2b=jnp.zeros((1, dim), jnp.float32),
        num_heads=num_heads,
    )


def init_params(key):
    ks = jax.random.split(key, 8 + DEPTH + DEC_DEPTH)
    patch_dim = IN_CHANS * PATCH * PATCH
    bound = 1.0 / math.sqrt(patch_dim)
    return dict(
        patch_w=_xavier_uniform(ks[0], patch_dim, EMBED_DIM, (patch_dim, EMBED_DIM)),
        patch_b=jax.random.uniform(ks[1], (EMBED_DIM,), jnp.float32, -bound, bound),
        cls_token=0.02 * jax.random.normal(ks[2], (1, 1, EMBED_DIM), jnp.float32),
        pos_embed=jnp.asarray(get_2d_sincos_pos_embed(EMBED_DIM, GRID_SZ, cls_token=True))[None],
        blocks=[init_block(ks[8 + i], EMBED_DIM, NUM_HEADS, MLP_RATIO) for i in range(DEPTH)],
        norm_w=jnp.ones((EMBED_DIM,), jnp.float32), norm_b=jnp.zeros((EMBED_DIM,), jnp.float32),
        dec_embed_w=_xavier_uniform(ks[3], EMBED_DIM, DEC_EMBED_DIM, (EMBED_DIM, DEC_EMBED_DIM)),
        dec_embed_b=jnp.zeros((DEC_EMBED_DIM,), jnp.float32),
        mask_token=0.02 * jax.random.normal(ks[4], (1, 1, DEC_EMBED_DIM), jnp.float32),
        dec_pos_embed=jnp.asarray(get_2d_sincos_pos_embed(DEC_EMBED_DIM, GRID_SZ, cls_token=True))[None],
        dec_blocks=[init_block(ks[8 + DEPTH + i], DEC_EMBED_DIM, DEC_NUM_HEADS, MLP_RATIO)
                    for i in range(DEC_DEPTH)],
        dec_norm_w=jnp.ones((DEC_EMBED_DIM,), jnp.float32),
        dec_norm_b=jnp.zeros((DEC_EMBED_DIM,), jnp.float32),
        dec_pred_w=_xavier_uniform(ks[5], DEC_EMBED_DIM, PATCH * PATCH * IN_CHANS,
                                   (DEC_EMBED_DIM, PATCH * PATCH * IN_CHANS)),
        dec_pred_b=jnp.zeros((PATCH * PATCH * IN_CHANS,), jnp.float32),
    )


# ----------------------------- patch operations ------------------------------
def extract_conv_patches(imgs):
    # flatten each patch in (C, p, p) order to match Conv2d weight flattening
    B, C, Hh, Ww = imgs.shape
    h, w = Hh // PATCH, Ww // PATCH
    x = imgs.reshape(B, C, h, PATCH, w, PATCH)
    x = jnp.transpose(x, (0, 2, 4, 1, 3, 5))
    return x.reshape(B, h * w, C * PATCH * PATCH)


def patch_embed(params, imgs):
    B = imgs.shape[0]
    patches = extract_conv_patches(imgs)
    x = pallas_linear(patches.reshape(B * NUM_PATCHES, -1), params["patch_w"], params["patch_b"])
    return x.reshape(B, NUM_PATCHES, EMBED_DIM)


def patchify(imgs):
    B = imgs.shape[0]
    h = w = IMG_SIZE // PATCH
    x = imgs.reshape(B, 3, h, PATCH, w, PATCH)
    x = jnp.transpose(x, (0, 2, 4, 3, 5, 1))  # nchpwq -> nhwpqc
    return x.reshape(B, h * w, PATCH * PATCH * 3)


# ---------------------- EMA features + EM clustering -------------------------
def get_features(params_ema, x):
    # x: (B, L, EMBED_DIM) already-embedded tokens (same code path as the PyTorch module)
    B = x.shape[0]
    cls = params_ema["cls_token"] + params_ema["pos_embed"][:, :1, :]
    cls = jnp.broadcast_to(cls, (B, 1, EMBED_DIM))
    x = jnp.concatenate([cls, x], axis=1)
    attn_set = None
    for p in params_ema["blocks"]:
        x, attn_hsum = fused_block(x, p, emit_attn=True)   # attn already summed over heads
        attn_set = attn_hsum if attn_set is None else attn_set + attn_hsum
    return attn_set[:, 1:, 1:]                             # (B, L, L)


def unsupervised_token_classification(params_ema, x, cluster_lo, cluster_hi, key):
    k_cluster, k_em = jax.random.split(key)
    attn_set = get_features(params_ema, x)
    # host-side concretization of the random cluster count (eager path, mirrors random.randint)
    kk = int(jax.random.randint(k_cluster, (), cluster_lo, cluster_hi + 1))
    _, meta_map = EM_jax(attn_set, k_em, stage_num=15, k=kk)
    return jnp.argmax(meta_map, axis=-1)  # (B, L) cluster ids


# ------------------------------ masking strategy ------------------------------
def strategy_masking_eff(params, params_ema, x, mask_ratio, key, epoch):
    low, high, total_epoch = 10, 40, 300.0
    alpha = math.pow(1.0 / total_epoch * (epoch + 1), 0.5)
    cluster_idx = (high - low) * (total_epoch - epoch) / total_epoch + low
    cluster_num = [int(cluster_idx), int(cluster_idx + 2)]
    parts_num = cluster_num[1] + 1
    N, L, D = x.shape
    W = int(math.sqrt(L))
    len_keep = int(L * (1 - mask_ratio))

    k_cls, k_grid, k_parts = jax.random.split(key, 3)
    tk_parts = unsupervised_token_classification(params_ema, x, cluster_num[0], cluster_num[1], k_cls)

    noise_grid = jax.random.uniform(k_grid, (2, 2), jnp.float32)
    idx = jnp.arange(L)
    noise = noise_grid[(idx // W) % 2, idx % 2]
    noise = jnp.broadcast_to(noise, (N, L))
    parts_noise_asign = jax.random.uniform(k_parts, (N, parts_num), jnp.float32)
    parts_noise = jnp.take_along_axis(parts_noise_asign, tk_parts, axis=1)
    noise = (1 - alpha) * noise + alpha * parts_noise

    ids_shuffle = jnp.argsort(noise, axis=1)
    ids_restore = jnp.argsort(ids_shuffle, axis=1)
    ids_keep = ids_shuffle[:, :len_keep]
    x_masked = jnp.take_along_axis(x, ids_keep[:, :, None], axis=1)
    mask = jnp.ones((N, L), jnp.float32).at[:, :len_keep].set(0.0)
    mask = jnp.take_along_axis(mask, ids_restore, axis=1)
    return x_masked, mask, ids_restore


# ---------------------------- encoder / decoder / loss ------------------------
def forward_encoder(params, params_ema, imgs, mask_ratio, key, epoch):
    x = patch_embed(params, imgs)
    x = x + params["pos_embed"][:, 1:, :]
    x, mask, ids_restore = strategy_masking_eff(params, params_ema, x, mask_ratio, key, epoch)
    B = x.shape[0]
    cls = params["cls_token"] + params["pos_embed"][:, :1, :]
    cls = jnp.broadcast_to(cls, (B, 1, EMBED_DIM))
    x = jnp.concatenate([cls, x], axis=1)
    for p in params["blocks"]:
        x, _ = fused_block(x, p, emit_attn=False)
    B, N, C = x.shape
    x = pallas_layernorm(x.reshape(B * N, C), params["norm_w"], params["norm_b"]).reshape(B, N, C)
    return x, mask, ids_restore


def forward_decoder(params, x, ids_restore):
    B, Nin, _ = x.shape
    x = pallas_linear(x.reshape(B * Nin, EMBED_DIM), params["dec_embed_w"], params["dec_embed_b"])
    x = x.reshape(B, Nin, DEC_EMBED_DIM)
    L = ids_restore.shape[1]
    n_mask = L + 1 - Nin
    mask_tokens = jnp.broadcast_to(params["mask_token"], (B, n_mask, DEC_EMBED_DIM))
    x_ = jnp.concatenate([x[:, 1:, :], mask_tokens], axis=1)
    x_ = jnp.take_along_axis(x_, ids_restore[:, :, None], axis=1)
    x = jnp.concatenate([x[:, :1, :], x_], axis=1)
    x = x + params["dec_pos_embed"]
    for p in params["dec_blocks"]:
        x, _ = fused_block(x, p, emit_attn=False)
    B, N, C = x.shape
    x = pallas_ln_linear(x.reshape(B * N, C), params["dec_norm_w"], params["dec_norm_b"],
                         params["dec_pred_w"], params["dec_pred_b"]).reshape(B, N, -1)
    return x[:, 1:, :]


def forward_loss(imgs, pred, mask):
    target = patchify(imgs)
    # norm_pix_loss=False
    return pallas_masked_mse(pred, target, mask)


def mae_forward(params, params_ema, imgs, mask_ratio, key, epoch=0):
    latent, mask, ids_restore = forward_encoder(params, params_ema, imgs, mask_ratio, key, epoch)
    pred = forward_decoder(params, latent, ids_restore)
    loss = forward_loss(imgs, pred, mask)
    return loss, pred, mask


# ----------------------------------- main -------------------------------------
if __name__ == "__main__":
    key = jax.random.PRNGKey(0)
    k_param, k_img, k_mask = jax.random.split(key, 3)
    params = init_params(k_param)
    params_ema = params  # EMA model initialized identical to the online model
    imgs = jax.random.normal(k_img, (2, IN_CHANS, IMG_SIZE, IMG_SIZE), jnp.float32)

    loss, pred, mask = mae_forward(params, params_ema, imgs, mask_ratio=0.75, key=k_mask, epoch=0)
    jax.block_until_ready((loss, pred, mask))

    assert pred.shape == (2, NUM_PATCHES, PATCH * PATCH * IN_CHANS)
    assert mask.shape == (2, NUM_PATCHES)
    assert bool(jnp.isfinite(loss))
    print("KERNEL_OK")
</pallas_src>

<mosaic_0001>
module attributes {stable_mosaic.version = 11 : i64} {
  func.func @_linear_kernel(%arg0: memref<32x48xf32, #tpu.memory_space<vmem>>, %arg1: memref<48x32xf32, #tpu.memory_space<vmem>>, %arg2: memref<1x32xf32, #tpu.memory_space<vmem>>, %arg3: memref<32x32xf32, #tpu.memory_space<vmem>>) attributes {dimension_semantics = [], scalar_prefetch = 0 : i64, scratch_operands = 0 : i64, tpu.core_type = #tpu.core_type<tc>} {
    %c0 = arith.constant 0 : index
    %c0_0 = arith.constant 0 : index
    %0 = vector.load %arg0[%c0, %c0_0] : memref<32x48xf32, #tpu.memory_space<vmem>>, vector<32x48xf32>
    %c0_1 = arith.constant 0 : index
    %c0_2 = arith.constant 0 : index
    %1 = vector.load %arg1[%c0_1, %c0_2] : memref<48x32xf32, #tpu.memory_space<vmem>>, vector<48x32xf32>
    %cst = arith.constant dense<0.000000e+00> : vector<32x32xf32>
    %2 = tpu.matmul %0, %1, %cst {dimension_numbers = #tpu.dot_dimension_numbers<[1], [0], [0], [1], [0, 0, 1, 1], [], []>} : vector<32x48xf32>, vector<48x32xf32>, vector<32x32xf32> -> vector<32x32xf32>
    %c0_3 = arith.constant 0 : index
    %c0_4 = arith.constant 0 : index
    %3 = vector.load %arg2[%c0_3, %c0_4] : memref<1x32xf32, #tpu.memory_space<vmem>>, vector<1x32xf32>
    %4 = vector.broadcast %3 : vector<1x32xf32> to vector<32x32xf32>
    %5 = arith.addf %2, %4 : vector<32x32xf32>
    %c0_5 = arith.constant 0 : index
    %c0_6 = arith.constant 0 : index
    %6 = vector.load %arg3[%c0_5, %c0_6] : memref<32x32xf32, #tpu.memory_space<vmem>>, vector<32x32xf32>
    tpu.vector_store %arg3[%c0_5, %c0_6], %5 {strides = array<i32>} : memref<32x32xf32, #tpu.memory_space<vmem>>, vector<32x32xf32>,
    return
  }
}

</mosaic_0001>

<llo_original>
// kernel: tpu_custom_call.1
$region0: #{tpu_custom_call.1}
  #allocation0 [shape = 'u32[]', space=smem, size = 0x4, offset = 0x4, fixed_abs, tag = 'smem constant byte address 0x4 - core index']
  #allocation1 [shape = 'u32[144,128]{1,0:T(1,128)}', space=vmem, size = 0x12000, scoped, tag = 'internal scratch']
  %s0 = inlined_call_operand.vmem [shape: f32[32,48], index: 0, kind: input, shape index: {}]
  %s1 = inlined_call_operand.vmem [shape: f32[48,32], index: 1, kind: input, shape index: {}]
  %s2 = inlined_call_operand.vmem [shape: f32[1,32], index: 2, kind: input, shape index: {}]
  %s3 = inlined_call_operand.hbm [shape: f32[32,32], index: 3, kind: output, shape index: {}]
  %s4 = sld [smem:[#allocation0]]
  $region22: #{tpu_custom_call.1} parent=0
    _
  %s6 = ssub.s32 1, %s4
  %s7 = scalar_select 0, %s6, %s4
  $region1: #{tpu_custom_call.1} parent=0
    #allocation2 [shape = 'u8[16384]{0}', space=vmem, size = 0x4000, scoped, tag = 'output window, operand 0, single buffered']
    #allocation3 [shape = 's32[1]{0}', space=sflag, size = 0x4, scoped, tag = 'scoped memory for tpu_custom_call.1']
    %8 = vsyncpa [#allocation3], 0
    // Predicated region
    $region2: #{tpu_custom_call.1} parent=1 // pred_check
      _
    $region3: #{tpu_custom_call.1} parent=1 // pred_check_branch
      %10 = sbr.rel (0) target = $region5
    $region4: #{tpu_custom_call.1} parent=1 // pred_region
      _
    $region5: #{tpu_custom_call.1} parent=1 // pred_fallthru
      _
    // Predicated region
    $region6: #{tpu_custom_call.1} parent=1 // pred_check
      _
    $region7: #{tpu_custom_call.1} parent=1 // pred_check_branch
      %12 = sbr.rel (0) target = $region9
    $region8: #{tpu_custom_call.1} parent=1 // pred_region
      _
    $region9: #{tpu_custom_call.1} parent=1 // pred_fallthru
      _
    // Predicated region
    $region10: #{tpu_custom_call.1} parent=1 // pred_check
      _
    $region11: #{tpu_custom_call.1} parent=1 // pred_check_branch
      %14 = sbr.rel (0) target = $region13
    $region12: #{tpu_custom_call.1} parent=1 // pred_region
      _
    $region13: #{tpu_custom_call.1} parent=1 // pred_fallthru
      _
    %v15 = vld [vmem:[%s0] sm:$0xff]
    %v16 = vld [vmem:[%s0 + $0x8] sm:$0xff]
    %v17 = vld [vmem:[%s0 + $0x10] sm:$0xff]
    %v18 = vld [vmem:[%s0 + $0x18] sm:$0xff]
    %v19 = vld [vmem:[%s1] sm:$0xff]
    %v20 = vld [vmem:[%s1 + $0x8] sm:$0xff]
    %v21 = vld [vmem:[%s1 + $0x10] sm:$0xff]
    %v22 = vld [vmem:[%s1 + $0x18] sm:$0xff]
    %v23 = vld [vmem:[%s1 + $0x20] sm:$0xff]
    %v24 = vld [vmem:[%s1 + $0x28] sm:$0xff]
    %v25 = vld [vmem:[%s2] sm:$0x1]
    %v27 = vlaneseq
    %v28 = vshrl.u32 %v27, 7
    %v29 = vsub.s32 0, %v28
    %v30 = vrot.slane %v25, %v29
    %vm32 = vcmask 392192
    %v34 = vsel %vm32, %v15, 0
    %v37 = vsel %vm32, %v16, 0
    %v40 = vsel %vm32, %v17, 0
    %v43 = vsel %vm32, %v18, 0
    %45 = vmatprep.subr.mxu0 0.0
    %46 = vmatpush1.msra.mxu0 0.0
    %47 = vmatprep.subr.mxu0 0.0
    %48 = vmatpush1.msra.mxu0 0.0
    %49 = vmatprep.subr.mxu0 0.0
    %50 = vmatpush1.msra.mxu0 0.0
    %51 = vmatprep.subr.mxu0 0.0
    %52 = vmatpush1.msra.mxu0 0.0
    %53 = vmatprep.subr.mxu0 0.0
    %54 = vmatpush1.msra.mxu0 0.0
    %55 = vmatprep.subr.mxu0 0.0
    %56 = vmatpush1.msra.mxu0 0.0
    %57 = vmatprep.subr.mxu0 0.0
    %58 = vmatpush1.msra.mxu0 0.0
    %59 = vmatprep.subr.mxu0 0.0
    %60 = vmatpush1.msra.mxu0 0.0
    %61 = vmatprep.subr.mxu0 0.0
    %62 = vmatpush1.msra.mxu0 0.0
    %63 = vmatprep.subr.mxu0 0.0
    %64 = vmatpush1.msra.mxu0 0.0
    %65 = vmatprep.subr.mxu0 0.0
    %66 = vmatpush1.msra.mxu0 %v24
    %67 = vmatprep.subr.mxu0 0.0
    %68 = vmatpush1.msra.mxu0 %v23
    %69 = vmatprep.subr.mxu0 0.0
    %70 = vmatpush1.msra.mxu0 %v22
    %71 = vmatprep.subr.mxu0 0.0
    %72 = vmatpush1.msra.mxu0 %v21
    %73 = vmatprep.subr.mxu0 0.0
    %74 = vmatpush1.msra.mxu0 %v20
    %75 = vmatprep.subr.mxu0 0.0
    %76 = vmatpush1.msra.mxu0 %v19
    %77 = vmatprep.subr.mxu0 0.0
    %78 = vmatpush2.msra.mxu0 0.0
    %79 = vmatprep.subr.mxu0 0.0
    %80 = vmatpush2.msra.mxu0 0.0
    %81 = vmatprep.subr.mxu0 0.0
    %82 = vmatpush2.msra.mxu0 0.0
    %83 = vmatprep.subr.mxu0 0.0
    %84 = vmatpush2.msra.mxu0 0.0
    %85 = vmatprep.subr.mxu0 0.0
    %86 = vmatpush2.msra.mxu0 0.0
    %87 = vmatprep.subr.mxu0 0.0
    %88 = vmatpush2.msra.mxu0 0.0
    %89 = vmatprep.subr.mxu0 0.0
    %90 = vmatpush2.msra.mxu0 0.0
    %91 = vmatprep.subr.mxu0 0.0
    %92 = vmatpush2.msra.mxu0 0.0
    %93 = vmatprep.subr.mxu0 0.0
    %94 = vmatpush2.msra.mxu0 0.0
    %95 = vmatprep.subr.mxu0 0.0
    %96 = vmatpush2.msra.mxu0 0.0
    %97 = vmatprep.subr.mxu0 0.0
    %98 = vmatpush2.msra.mxu0 0.0
    %99 = vmatprep.subr.mxu0 0.0
    %100 = vmatpush2.msra.mxu0 0.0
    %101 = vmatprep.subr.mxu0 0.0
    %102 = vmatpush2.msra.mxu0 0.0
    %103 = vmatprep.subr.mxu0 0.0
    %104 = vmatpush2.msra.mxu0 0.0
    %105 = vmatprep.subr.mxu0 0.0
    %106 = vmatpush2.msra.mxu0 0.0
    %107 = vmatprep.subr.mxu0 0.0
    %108 = vmatpush2.msra.mxu0 0.0
    %109 = vmatprep.mubr.f32.mxu0 0.0
    %110 = vmatmul.mubr.f32.gmra.mxu0 %v34
    %v111 = vpop.f32.mrf.mxu0
    %v112 = vadd.f32 %v30, %v111
    %v113 = vpop.f32.mrf.mxu0
    %114 = vmatprep.mubr.f32.mxu0 0.0
    %115 = vmatmul.mubr.f32.gmra.mxu0 %v37
    %v116 = vpop.f32.mrf.mxu0
    %v117 = vadd.f32 %v30, %v116
    %v118 = vpop.f32.mrf.mxu0
    %119 = vmatprep.mubr.f32.mxu0 0.0
    %120 = vmatmul.mubr.f32.gmra.mxu0 %v40
    %v121 = vpop.f32.mrf.mxu0
    %v122 = vadd.f32 %v30, %v121
    %v123 = vpop.f32.mrf.mxu0
    %124 = vmatprep.mubr.f32.mxu0 0.0
    %125 = vmatmul.mubr.f32.gmra.mxu0 %v43
    %v126 = vpop.f32.mrf.mxu0
    %v127 = vadd.f32 %v30, %v126
    %v128 = vpop.f32.mrf.mxu0
    %129 = vdwg.mxu0
    %vm130 = vcmask 261120
    %131 = vst.msk [vmem:[#allocation2] sm:$0xff] %vm130, %v112
    %132 = vst.msk [vmem:[#allocation2 + $0x8] sm:$0xff] %vm130, %v117
    %133 = vst.msk [vmem:[#allocation2 + $0x10] sm:$0xff] %vm130, %v122
    %134 = vst.msk [vmem:[#allocation2 + $0x18] sm:$0xff] %vm130, %v127
    // Predicated region
    $region14: #{tpu_custom_call.1} parent=1 // pred_check
      _
    $region15: #{tpu_custom_call.1} parent=1 // pred_check_branch
      %136 = sbr.rel (0) target = $region17
    $region16: #{tpu_custom_call.1} parent=1 // pred_region
      %s138 = ssub.s32 512, 512
      %139 = vsyncadd [#allocation3], %s138
      %s140 = sshll.u32 [#allocation2], 4
      %s141 = int_to_ptr.vmem [resolvable:$true] %s140
      %146 = dma.vmem_to_hbm [thread:$0]  %s141, 512, %s3, [#allocation3], 128, 128, 8
    $region17: #{tpu_custom_call.1} parent=1 // pred_fallthru
      _
    // Predicated region
    $region18: #{tpu_custom_call.1} parent=1 // pred_check
      _
    $region19: #{tpu_custom_call.1} parent=1 // pred_check_branch
      %148 = sbr.rel (0) target = $region21
    $region20: #{tpu_custom_call.1} parent=1 // pred_region
      %149 = dma.done [#allocation3], 512
    $region21: #{tpu_custom_call.1} parent=1 // pred_fallthru
      _
    %150 = vsyncpa [#allocation3], 1

</llo_original>
